<compile_context>
chip_gen: v7x
topology: tpu7x:2x2x1
jax: 0.10.0
libtpu: 0.0.40
codegen_flags: <defaults>
</compile_context>

<pallas_src>
import functools

import jax
import jax.numpy as jnp
from jax import lax
from jax.experimental import pallas as pl
from jax.experimental.pallas import tpu as pltpu


def _dense_layer_kernel(x_ref, w_ref, b_ref, o_ref, xwin_ref, patch_ref,
                        *, H, W, Cin, Cout, K, TH, slope):
    """One (batch n, row-tile t) grid step.

    x_ref    : (1, Cin, H*W)           flattened input image (resident across t)
    w_ref    : (Cout, K*K*Cin)         conv weights, tap-major / channel-minor
    b_ref    : (Cout, 1)               bias
    o_ref    : (1, Cin+Cout, TH*W)     row-tile of the concatenated output
    xwin_ref : (nT, Cin, TH*W + 2*PAD) zero-padded flat window per tile (built at t==0)
    patch_ref: (K*K*Cin, TH*W)         im2col patch matrix (single MXU matmul)
    """
    p = K // 2
    PAD = p * W + p                 # flat halo so every conv tap is an in-bounds slice
    HW = H * W
    THW = TH * W
    n_tiles = H // TH
    t = pl.program_id(1)

    # ---- build all zero-padded row-tile windows once per batch element -------------
    # (static Python loop -> only static lane slices; dynamic indexing is confined to
    #  the leading scratch axis below.  Gated on t==0 only, so it is megacore-safe.)
    @pl.when(t == 0)
    def _():
        for tt in range(n_tiles):
            lo = tt * THW - PAD               # global flat start of this window
            hi = tt * THW + THW + PAD         # global flat end
            src_lo, src_hi = max(lo, 0), min(hi, HW)
            dst_lo, dst_hi = src_lo - lo, src_hi - lo
            if dst_lo > 0:                    # zero head pad (top image border)
                xwin_ref[tt, :, :dst_lo] = jnp.zeros((Cin, dst_lo), xwin_ref.dtype)
            if dst_hi < hi - lo:              # zero tail pad (bottom image border)
                xwin_ref[tt, :, dst_hi:] = jnp.zeros((Cin, (hi - lo) - dst_hi),
                                                     xwin_ref.dtype)
            xwin_ref[tt, :, dst_lo:dst_hi] = x_ref[0, :, src_lo:src_hi]

    # ---- this tile's padded window (dynamic index on the major axis only) ----------
    xwin = xwin_ref[t]                        # (Cin, THW + 2*PAD)

    # ---- im2col: one lane-masked shifted slice per tap, staged into VMEM -----------
    # Horizontal out-of-range taps are masked (they would wrap to the adjacent row);
    # vertical out-of-range taps read the zero padding of the window.
    col = lax.broadcasted_iota(jnp.int32, (1, THW), 1) % W
    for kh in range(K):
        for kw in range(K):
            tap = kh * K + kw
            off = kh * W + kw                                     # static slice start
            seg = xwin[:, off:off + THW]                          # (Cin, THW)
            shifted = col + (kw - p)
            mask = (shifted >= 0) & (shifted < W)                 # (1, THW)
            patch_ref[tap * Cin:(tap + 1) * Cin, :] = jnp.where(
                mask, seg, 0.0).astype(patch_ref.dtype)

    # ---- conv = ONE MXU matmul over the full K*K*Cin contraction --------------------
    y = jnp.dot(w_ref[...], patch_ref[...],
                preferred_element_type=jnp.float32)               # (Cout, THW)
    y = y + b_ref[...].astype(jnp.float32)                        # bias (lane bcast)
    y = jnp.where(y >= 0, y, slope * y)                           # LeakyReLU(slope)

    # ---- fused channel concat: [x, act], single lane-dense store --------------------
    x_pass = xwin[:, PAD:PAD + THW]                               # (Cin, THW)
    o_ref[0, :, :] = jnp.concatenate([x_pass.astype(jnp.float32), y],
                                     axis=0).astype(o_ref.dtype)


def dense_layer_forward(x, weight, bias, *, kernel_size, negative_slope=0.2,
                        tile_h=None):
    """Forward pass matching the PyTorch DenseLayer (NCHW in / NCHW out).

    x      : (N, Cin, H, W)
    weight : (Cout, Cin, K, K)   (PyTorch OIHW)
    bias   : (Cout,)
    returns: (N, Cin + Cout, H, W)
    """
    N, Cin, H, W = x.shape
    Cout = weight.shape[0]
    K = kernel_size
    if K % 2 != 1:
        # nn.Conv2d with padding=K//2 is only shape-preserving for odd K; even K would
        # change H/W and make the torch.cat in the reference module fail as well.
        raise ValueError(f"kernel_size must be odd for DenseLayer, got {K}")
    p = K // 2
    HW = H * W

    if tile_h is None:
        tile_h = H                       # largest step that fits -> fewest grid steps
    assert H % tile_h == 0, "tile_h must divide H"
    THW = tile_h * W
    assert THW == HW or THW % 128 == 0, "row tile must stay lane-dense (mult of 128)"

    C_total = Cin + Cout
    KKC = K * K * Cin
    PAD = p * W + p
    n_tiles = H // tile_h

    # Free, contiguous reshapes / tiny weight reorder done once outside the kernel.
    x_flat = x.reshape(N, Cin, HW)
    w2d = jnp.transpose(weight, (0, 2, 3, 1)).reshape(Cout, KKC)  # (o, kh, kw, c) flat
    b2d = bias.reshape(Cout, 1)

    kernel = functools.partial(
        _dense_layer_kernel,
        H=H, W=W, Cin=Cin, Cout=Cout, K=K, TH=tile_h, slope=negative_slope)

    out_flat = pl.pallas_call(
        kernel,
        out_shape=jax.ShapeDtypeStruct((N, C_total, HW), x.dtype),
        grid_spec=pltpu.PrefetchScalarGridSpec(
            num_scalar_prefetch=0,
            grid=(N, n_tiles),
            in_specs=[
                # whole flattened image, resident across the row-tile axis
                pl.BlockSpec((1, Cin, HW), lambda n, t: (n, 0, 0)),
                pl.BlockSpec((Cout, KKC), lambda n, t: (0, 0)),
                pl.BlockSpec((Cout, 1), lambda n, t: (0, 0)),
            ],
            out_specs=pl.BlockSpec((1, C_total, THW), lambda n, t: (n, 0, t)),
            scratch_shapes=[
                pltpu.VMEM((n_tiles, Cin, THW + 2 * PAD), x.dtype),  # padded windows
                pltpu.VMEM((KKC, THW), x.dtype),                     # im2col patch
            ],
        ),
        compiler_params=pltpu.CompilerParams(
            # batch axis feeds both v7x TensorCores; row-tile axis carries per-batch
            # scratch state and must stay sequential.
            dimension_semantics=("parallel", "arbitrary"),
            # explicit scoped-VMEM budget, safe on v5e/v6e (128 MiB) and v7x (64 MiB)
            vmem_limit_bytes=32 * 1024 * 1024,
        ),
    )(x_flat, w2d, b2d)

    return out_flat.reshape(N, C_total, H, W)


if __name__ == "__main__":
    key = jax.random.PRNGKey(0)
    k_x, k_w, k_b = jax.random.split(key, 3)

    # Small shapes consistent with the module: N=2, Cin=4, Cout=8, H=W=16, K=3.
    N, Cin, Cout, H, W, K = 2, 4, 8, 16, 16, 3

    x = jax.random.normal(k_x, (N, Cin, H, W), dtype=jnp.float32)
    fan_in = Cin * K * K
    bound = 1.0 / float(fan_in) ** 0.5
    weight = jax.random.uniform(k_w, (Cout, Cin, K, K), jnp.float32, -bound, bound)
    bias = jax.random.uniform(k_b, (Cout,), jnp.float32, -bound, bound)

    # tile_h=8 -> grid (2, 2): exercises the row-tiling path with a 128-lane output tile.
    out = dense_layer_forward(x, weight, bias, kernel_size=K, tile_h=8)
    out = jax.block_until_ready(out)

    # Reference: XLA conv (same semantics as nn.Conv2d + LeakyReLU(0.2) + cat).
    ref_conv = lax.conv_general_dilated(
        x, weight, window_strides=(1, 1), padding=[(K // 2, K // 2)] * 2,
        dimension_numbers=("NCHW", "OIHW", "NCHW"),
        precision=lax.Precision.HIGHEST,
    ) + bias.reshape(1, Cout, 1, 1)
    ref_act = jnp.where(ref_conv >= 0, ref_conv, 0.2 * ref_conv)
    ref = jnp.concatenate([x, ref_act], axis=1)

    assert out.shape == (N, Cin + Cout, H, W), out.shape
    max_err = float(jnp.max(jnp.abs(out - ref)))
    assert jnp.allclose(out, ref, atol=1e-3, rtol=1e-3), f"mismatch, max_err={max_err}"

    print("KERNEL_OK")
</pallas_src>

<mosaic_0001>
module attributes {stable_mosaic.version = 11 : i64} {
  func.func @_dense_layer_kernel(%arg0: i32, %arg1: i32, %arg2: memref<1x4x256xf32, #tpu.memory_space<vmem>>, %arg3: memref<8x36xf32, #tpu.memory_space<vmem>>, %arg4: memref<8x1xf32, #tpu.memory_space<vmem>>, %arg5: memref<1x12x128xf32, #tpu.memory_space<vmem>>, %arg6: memref<2x4x162xf32, #tpu.memory_space<vmem>>, %arg7: memref<36x128xf32, #tpu.memory_space<vmem>>) attributes {dimension_semantics = [#tpu.dimension_semantics<parallel>, #tpu.dimension_semantics<arbitrary>], iteration_bounds = array<i64: 2, 2>, scalar_prefetch = 0 : i64, scratch_operands = 2 : i64, tpu.core_type = #tpu.core_type<tc>, window_params = [{transform_indices = @transform_0, window_bounds = array<i64: 1, 4, 256>}, {pipeline_mode = #tpu.pipeline_mode<synchronous>, transform_indices = @transform_1, window_bounds = array<i64: 8, 36>}, {pipeline_mode = #tpu.pipeline_mode<synchronous>, transform_indices = @transform_2, window_bounds = array<i64: 8, 1>}, {transform_indices = @transform_3, window_bounds = array<i64: 1, 12, 128>}]} {
    %c0_i32 = arith.constant 0 : i32
    %0 = arith.cmpi eq, %arg1, %c0_i32 : i32
    %1 = arith.extui %0 : i1 to i32
    %c0_i32_0 = arith.constant 0 : i32
    %2 = arith.cmpi ne, %1, %c0_i32_0 : i32
    scf.if %2 {
      %cst_62 = arith.constant 0.000000e+00 : f32
      %156 = vector.broadcast %cst_62 : f32 to vector<4x17xf32>
      %c0_63 = arith.constant 0 : index
      %c0_64 = arith.constant 0 : index
      %c0_65 = arith.constant 0 : index
      %157 = vector.load %arg6[%c0_63, %c0_64, %c0_65] : memref<2x4x162xf32, #tpu.memory_space<vmem>>, vector<1x4x17xf32>
      %158 = vector.shape_cast %157 : vector<1x4x17xf32> to vector<4x17xf32>
      %159 = vector.shape_cast %156 : vector<4x17xf32> to vector<1x4x17xf32>
      tpu.vector_store %arg6[%c0_63, %c0_64, %c0_65], %159 {strides = array<i32>} : memref<2x4x162xf32, #tpu.memory_space<vmem>>, vector<1x4x17xf32>,
      %c0_66 = arith.constant 0 : index
      %c0_67 = arith.constant 0 : index
      %c0_68 = arith.constant 0 : index
      %160 = vector.load %arg2[%c0_66, %c0_67, %c0_68] : memref<1x4x256xf32, #tpu.memory_space<vmem>>, vector<1x4x145xf32>
      %161 = vector.shape_cast %160 : vector<1x4x145xf32> to vector<4x145xf32>
      %c0_69 = arith.constant 0 : index
      %c0_70 = arith.constant 0 : index
      %c17 = arith.constant 17 : index
      %162 = vector.load %arg6[%c0_69, %c0_70, %c17] : memref<2x4x162xf32, #tpu.memory_space<vmem>>, vector<1x4x145xf32>
      %163 = vector.shape_cast %162 : vector<1x4x145xf32> to vector<4x145xf32>
      %164 = vector.shape_cast %161 : vector<4x145xf32> to vector<1x4x145xf32>
      tpu.vector_store %arg6[%c0_69, %c0_70, %c17], %164 {strides = array<i32>} : memref<2x4x162xf32, #tpu.memory_space<vmem>>, vector<1x4x145xf32>,
      %cst_71 = arith.constant 0.000000e+00 : f32
      %165 = vector.broadcast %cst_71 : f32 to vector<4x17xf32>
      %c1 = arith.constant 1 : index
      %c0_72 = arith.constant 0 : index
      %c145 = arith.constant 145 : index
      %166 = vector.load %arg6[%c1, %c0_72, %c145] : memref<2x4x162xf32, #tpu.memory_space<vmem>>, vector<1x4x17xf32>
      %167 = vector.shape_cast %166 : vector<1x4x17xf32> to vector<4x17xf32>
      %168 = vector.shape_cast %165 : vector<4x17xf32> to vector<1x4x17xf32>
      tpu.vector_store %arg6[%c1, %c0_72, %c145], %168 {strides = array<i32>} : memref<2x4x162xf32, #tpu.memory_space<vmem>>, vector<1x4x17xf32>,
      %c0_73 = arith.constant 0 : index
      %c0_74 = arith.constant 0 : index
      %c111 = arith.constant 111 : index
      %169 = vector.load %arg2[%c0_73, %c0_74, %c111] : memref<1x4x256xf32, #tpu.memory_space<vmem>>, vector<1x4x145xf32>
      %170 = vector.shape_cast %169 : vector<1x4x145xf32> to vector<4x145xf32>
      %c1_75 = arith.constant 1 : index
      %c0_76 = arith.constant 0 : index
      %c0_77 = arith.constant 0 : index
      %171 = vector.load %arg6[%c1_75, %c0_76, %c0_77] : memref<2x4x162xf32, #tpu.memory_space<vmem>>, vector<1x4x145xf32>
      %172 = vector.shape_cast %171 : vector<1x4x145xf32> to vector<4x145xf32>
      %173 = vector.shape_cast %170 : vector<4x145xf32> to vector<1x4x145xf32>
      tpu.vector_store %arg6[%c1_75, %c0_76, %c0_77], %173 {strides = array<i32>} : memref<2x4x162xf32, #tpu.memory_space<vmem>>, vector<1x4x145xf32>,
    } else {
    }
    %3 = arith.index_cast %arg1 : i32 to index
    %c0 = arith.constant 0 : index
    %c0_1 = arith.constant 0 : index
    %4 = vector.load %arg6[%3, %c0, %c0_1] : memref<2x4x162xf32, #tpu.memory_space<vmem>>, vector<1x4x162xf32>
    %5 = vector.shape_cast %4 : vector<1x4x162xf32> to vector<4x162xf32>
    %6 = tpu.iota {dimensions = array<i32: 1>} : vector<1x128xi32>
    %c16_i32 = arith.constant 16 : i32
    %c0_i32_2 = arith.constant 0 : i32
    %7 = arith.cmpi eq, %c16_i32, %c0_i32_2 : i32
    %c1_i32 = arith.constant 1 : i32
    %8 = arith.select %7, %c1_i32, %c16_i32 : i32
    %9 = vector.broadcast %8 : i32 to vector<1x128xi32>
    %10 = arith.remsi %6, %9 : vector<1x128xi32>
    %c0_i32_3 = arith.constant 0 : i32
    %11 = vector.broadcast %c0_i32_3 : i32 to vector<1x128xi32>
    %12 = arith.cmpi ne, %10, %11 : vector<1x128xi32>
    %c0_i32_4 = arith.constant 0 : i32
    %13 = vector.broadcast %c0_i32_4 : i32 to vector<1x128xi32>
    %14 = arith.cmpi slt, %10, %13 : vector<1x128xi32>
    %c0_i32_5 = arith.constant 0 : i32
    %15 = arith.cmpi slt, %8, %c0_i32_5 : i32
    %16 = vector.broadcast %15 : i1 to vector<1x128xi1>
    %17 = vector.broadcast %16 : vector<1x128xi1> to vector<1x128xi1>
    %18 = arith.xori %14, %17 : vector<1x128xi1>
    %19 = arith.andi %18, %12 : vector<1x128xi1>
    %20 = vector.broadcast %8 : i32 to vector<1x128xi32>
    %21 = arith.addi %10, %20 : vector<1x128xi32>
    %22 = arith.select %19, %21, %10 : vector<1x128xi1>, vector<1x128xi32>
    %23 = vector.extract_strided_slice %5 {offsets = [0, 0], sizes = [4, 128], strides = [1, 1]} : vector<4x162xf32> to vector<4x128xf32>
    %c-1_i32 = arith.constant -1 : i32
    %24 = vector.broadcast %c-1_i32 : i32 to vector<1x128xi32>
    %25 = arith.addi %22, %24 : vector<1x128xi32>
    %c0_i32_6 = arith.constant 0 : i32
    %26 = vector.broadcast %c0_i32_6 : i32 to vector<1x128xi32>
    %27 = arith.cmpi sge, %25, %26 : vector<1x128xi32>
    %c16_i32_7 = arith.constant 16 : i32
    %28 = vector.broadcast %c16_i32_7 : i32 to vector<1x128xi32>
    %29 = arith.cmpi slt, %25, %28 : vector<1x128xi32>
    %30 = arith.andi %27, %29 : vector<1x128xi1>
    %cst = arith.constant 0.000000e+00 : f32
    %31 = vector.shape_cast %30 : vector<1x128xi1> to vector<1x128xi1>
    %32 = vector.broadcast %31 : vector<1x128xi1> to vector<4x128xi1>
    %33 = vector.broadcast %cst : f32 to vector<4x128xf32>
    %34 = arith.select %32, %23, %33 : vector<4x128xi1>, vector<4x128xf32>
    %c0_8 = arith.constant 0 : index
    %c0_9 = arith.constant 0 : index
    %35 = vector.load %arg7[%c0_8, %c0_9] : memref<36x128xf32, #tpu.memory_space<vmem>>, vector<4x128xf32>
    tpu.vector_store %arg7[%c0_8, %c0_9], %34 {strides = array<i32>} : memref<36x128xf32, #tpu.memory_space<vmem>>, vector<4x128xf32>,
    %36 = vector.extract_strided_slice %5 {offsets = [0, 1], sizes = [4, 128], strides = [1, 1]} : vector<4x162xf32> to vector<4x128xf32>
    %c0_i32_10 = arith.constant 0 : i32
    %37 = vector.broadcast %c0_i32_10 : i32 to vector<1x128xi32>
    %38 = arith.addi %22, %37 : vector<1x128xi32>
    %c0_i32_11 = arith.constant 0 : i32
    %39 = vector.broadcast %c0_i32_11 : i32 to vector<1x128xi32>
    %40 = arith.cmpi sge, %38, %39 : vector<1x128xi32>
    %c16_i32_12 = arith.constant 16 : i32
    %41 = vector.broadcast %c16_i32_12 : i32 to vector<1x128xi32>
    %42 = arith.cmpi slt, %38, %41 : vector<1x128xi32>
    %43 = arith.andi %40, %42 : vector<1x128xi1>
    %cst_13 = arith.constant 0.000000e+00 : f32
    %44 = vector.shape_cast %43 : vector<1x128xi1> to vector<1x128xi1>
    %45 = vector.broadcast %44 : vector<1x128xi1> to vector<4x128xi1>
    %46 = vector.broadcast %cst_13 : f32 to vector<4x128xf32>
    %47 = arith.select %45, %36, %46 : vector<4x128xi1>, vector<4x128xf32>
    %c4 = arith.constant 4 : index
    %c0_14 = arith.constant 0 : index
    %48 = vector.load %arg7[%c4, %c0_14] : memref<36x128xf32, #tpu.memory_space<vmem>>, vector<4x128xf32>
    tpu.vector_store %arg7[%c4, %c0_14], %47 {strides = array<i32>} : memref<36x128xf32, #tpu.memory_space<vmem>>, vector<4x128xf32>,
    %49 = vector.extract_strided_slice %5 {offsets = [0, 2], sizes = [4, 128], strides = [1, 1]} : vector<4x162xf32> to vector<4x128xf32>
    %c1_i32_15 = arith.constant 1 : i32
    %50 = vector.broadcast %c1_i32_15 : i32 to vector<1x128xi32>
    %51 = arith.addi %22, %50 : vector<1x128xi32>
    %c0_i32_16 = arith.constant 0 : i32
    %52 = vector.broadcast %c0_i32_16 : i32 to vector<1x128xi32>
    %53 = arith.cmpi sge, %51, %52 : vector<1x128xi32>
    %c16_i32_17 = arith.constant 16 : i32
    %54 = vector.broadcast %c16_i32_17 : i32 to vector<1x128xi32>
    %55 = arith.cmpi slt, %51, %54 : vector<1x128xi32>
    %56 = arith.andi %53, %55 : vector<1x128xi1>
    %cst_18 = arith.constant 0.000000e+00 : f32
    %57 = vector.shape_cast %56 : vector<1x128xi1> to vector<1x128xi1>
    %58 = vector.broadcast %57 : vector<1x128xi1> to vector<4x128xi1>
    %59 = vector.broadcast %cst_18 : f32 to vector<4x128xf32>
    %60 = arith.select %58, %49, %59 : vector<4x128xi1>, vector<4x128xf32>
    %c8 = arith.constant 8 : index
    %c0_19 = arith.constant 0 : index
    %61 = vector.load %arg7[%c8, %c0_19] : memref<36x128xf32, #tpu.memory_space<vmem>>, vector<4x128xf32>
    tpu.vector_store %arg7[%c8, %c0_19], %60 {strides = array<i32>} : memref<36x128xf32, #tpu.memory_space<vmem>>, vector<4x128xf32>,
    %62 = vector.extract_strided_slice %5 {offsets = [0, 16], sizes = [4, 128], strides = [1, 1]} : vector<4x162xf32> to vector<4x128xf32>
    %c-1_i32_20 = arith.constant -1 : i32
    %63 = vector.broadcast %c-1_i32_20 : i32 to vector<1x128xi32>
    %64 = arith.addi %22, %63 : vector<1x128xi32>
    %c0_i32_21 = arith.constant 0 : i32
    %65 = vector.broadcast %c0_i32_21 : i32 to vector<1x128xi32>
    %66 = arith.cmpi sge, %64, %65 : vector<1x128xi32>
    %c16_i32_22 = arith.constant 16 : i32
    %67 = vector.broadcast %c16_i32_22 : i32 to vector<1x128xi32>
    %68 = arith.cmpi slt, %64, %67 : vector<1x128xi32>
    %69 = arith.andi %66, %68 : vector<1x128xi1>
    %cst_23 = arith.constant 0.000000e+00 : f32
    %70 = vector.shape_cast %69 : vector<1x128xi1> to vector<1x128xi1>
    %71 = vector.broadcast %70 : vector<1x128xi1> to vector<4x128xi1>
    %72 = vector.broadcast %cst_23 : f32 to vector<4x128xf32>
    %73 = arith.select %71, %62, %72 : vector<4x128xi1>, vector<4x128xf32>
    %c12 = arith.constant 12 : index
    %c0_24 = arith.constant 0 : index
    %74 = vector.load %arg7[%c12, %c0_24] : memref<36x128xf32, #tpu.memory_space<vmem>>, vector<4x128xf32>
    tpu.vector_store %arg7[%c12, %c0_24], %73 {strides = array<i32>} : memref<36x128xf32, #tpu.memory_space<vmem>>, vector<4x128xf32>,
    %75 = vector.extract_strided_slice %5 {offsets = [0, 17], sizes = [4, 128], strides = [1, 1]} : vector<4x162xf32> to vector<4x128xf32>
    %c0_i32_25 = arith.constant 0 : i32
    %76 = vector.broadcast %c0_i32_25 : i32 to vector<1x128xi32>
    %77 = arith.addi %22, %76 : vector<1x128xi32>
    %c0_i32_26 = arith.constant 0 : i32
    %78 = vector.broadcast %c0_i32_26 : i32 to vector<1x128xi32>
    %79 = arith.cmpi sge, %77, %78 : vector<1x128xi32>
    %c16_i32_27 = arith.constant 16 : i32
    %80 = vector.broadcast %c16_i32_27 : i32 to vector<1x128xi32>
    %81 = arith.cmpi slt, %77, %80 : vector<1x128xi32>
    %82 = arith.andi %79, %81 : vector<1x128xi1>
    %cst_28 = arith.constant 0.000000e+00 : f32
    %83 = vector.shape_cast %82 : vector<1x128xi1> to vector<1x128xi1>
    %84 = vector.broadcast %83 : vector<1x128xi1> to vector<4x128xi1>
    %85 = vector.broadcast %cst_28 : f32 to vector<4x128xf32>
    %86 = arith.select %84, %75, %85 : vector<4x128xi1>, vector<4x128xf32>
    %c16 = arith.constant 16 : index
    %c0_29 = arith.constant 0 : index
    %87 = vector.load %arg7[%c16, %c0_29] : memref<36x128xf32, #tpu.memory_space<vmem>>, vector<4x128xf32>
    tpu.vector_store %arg7[%c16, %c0_29], %86 {strides = array<i32>} : memref<36x128xf32, #tpu.memory_space<vmem>>, vector<4x128xf32>,
    %88 = vector.extract_strided_slice %5 {offsets = [0, 18], sizes = [4, 128], strides = [1, 1]} : vector<4x162xf32> to vector<4x128xf32>
    %c1_i32_30 = arith.constant 1 : i32
    %89 = vector.broadcast %c1_i32_30 : i32 to vector<1x128xi32>
    %90 = arith.addi %22, %89 : vector<1x128xi32>
    %c0_i32_31 = arith.constant 0 : i32
    %91 = vector.broadcast %c0_i32_31 : i32 to vector<1x128xi32>
    %92 = arith.cmpi sge, %90, %91 : vector<1x128xi32>
    %c16_i32_32 = arith.constant 16 : i32
    %93 = vector.broadcast %c16_i32_32 : i32 to vector<1x128xi32>
    %94 = arith.cmpi slt, %90, %93 : vector<1x128xi32>
    %95 = arith.andi %92, %94 : vector<1x128xi1>
    %cst_33 = arith.constant 0.000000e+00 : f32
    %96 = vector.shape_cast %95 : vector<1x128xi1> to vector<1x128xi1>
    %97 = vector.broadcast %96 : vector<1x128xi1> to vector<4x128xi1>
    %98 = vector.broadcast %cst_33 : f32 to vector<4x128xf32>
    %99 = arith.select %97, %88, %98 : vector<4x128xi1>, vector<4x128xf32>
    %c20 = arith.constant 20 : index
    %c0_34 = arith.constant 0 : index
    %100 = vector.load %arg7[%c20, %c0_34] : memref<36x128xf32, #tpu.memory_space<vmem>>, vector<4x128xf32>
    tpu.vector_store %arg7[%c20, %c0_34], %99 {strides = array<i32>} : memref<36x128xf32, #tpu.memory_space<vmem>>, vector<4x128xf32>,
    %101 = vector.extract_strided_slice %5 {offsets = [0, 32], sizes = [4, 128], strides = [1, 1]} : vector<4x162xf32> to vector<4x128xf32>
    %c-1_i32_35 = arith.constant -1 : i32
    %102 = vector.broadcast %c-1_i32_35 : i32 to vector<1x128xi32>
    %103 = arith.addi %22, %102 : vector<1x128xi32>
    %c0_i32_36 = arith.constant 0 : i32
    %104 = vector.broadcast %c0_i32_36 : i32 to vector<1x128xi32>
    %105 = arith.cmpi sge, %103, %104 : vector<1x128xi32>
    %c16_i32_37 = arith.constant 16 : i32
    %106 = vector.broadcast %c16_i32_37 : i32 to vector<1x128xi32>
    %107 = arith.cmpi slt, %103, %106 : vector<1x128xi32>
    %108 = arith.andi %105, %107 : vector<1x128xi1>
    %cst_38 = arith.constant 0.000000e+00 : f32
    %109 = vector.shape_cast %108 : vector<1x128xi1> to vector<1x128xi1>
    %110 = vector.broadcast %109 : vector<1x128xi1> to vector<4x128xi1>
    %111 = vector.broadcast %cst_38 : f32 to vector<4x128xf32>
    %112 = arith.select %110, %101, %111 : vector<4x128xi1>, vector<4x128xf32>
    %c24 = arith.constant 24 : index
    %c0_39 = arith.constant 0 : index
    %113 = vector.load %arg7[%c24, %c0_39] : memref<36x128xf32, #tpu.memory_space<vmem>>, vector<4x128xf32>
    tpu.vector_store %arg7[%c24, %c0_39], %112 {strides = array<i32>} : memref<36x128xf32, #tpu.memory_space<vmem>>, vector<4x128xf32>,
    %114 = vector.extract_strided_slice %5 {offsets = [0, 33], sizes = [4, 128], strides = [1, 1]} : vector<4x162xf32> to vector<4x128xf32>
    %c0_i32_40 = arith.constant 0 : i32
    %115 = vector.broadcast %c0_i32_40 : i32 to vector<1x128xi32>
    %116 = arith.addi %22, %115 : vector<1x128xi32>
    %c0_i32_41 = arith.constant 0 : i32
    %117 = vector.broadcast %c0_i32_41 : i32 to vector<1x128xi32>
    %118 = arith.cmpi sge, %116, %117 : vector<1x128xi32>
    %c16_i32_42 = arith.constant 16 : i32
    %119 = vector.broadcast %c16_i32_42 : i32 to vector<1x128xi32>
    %120 = arith.cmpi slt, %116, %119 : vector<1x128xi32>
    %121 = arith.andi %118, %120 : vector<1x128xi1>
    %cst_43 = arith.constant 0.000000e+00 : f32
    %122 = vector.shape_cast %121 : vector<1x128xi1> to vector<1x128xi1>
    %123 = vector.broadcast %122 : vector<1x128xi1> to vector<4x128xi1>
    %124 = vector.broadcast %cst_43 : f32 to vector<4x128xf32>
    %125 = arith.select %123, %114, %124 : vector<4x128xi1>, vector<4x128xf32>
    %c28 = arith.constant 28 : index
    %c0_44 = arith.constant 0 : index
    %126 = vector.load %arg7[%c28, %c0_44] : memref<36x128xf32, #tpu.memory_space<vmem>>, vector<4x128xf32>
    tpu.vector_store %arg7[%c28, %c0_44], %125 {strides = array<i32>} : memref<36x128xf32, #tpu.memory_space<vmem>>, vector<4x128xf32>,
    %127 = vector.extract_strided_slice %5 {offsets = [0, 34], sizes = [4, 128], strides = [1, 1]} : vector<4x162xf32> to vector<4x128xf32>
    %c1_i32_45 = arith.constant 1 : i32
    %128 = vector.broadcast %c1_i32_45 : i32 to vector<1x128xi32>
    %129 = arith.addi %22, %128 : vector<1x128xi32>
    %c0_i32_46 = arith.constant 0 : i32
    %130 = vector.broadcast %c0_i32_46 : i32 to vector<1x128xi32>
    %131 = arith.cmpi sge, %129, %130 : vector<1x128xi32>
    %c16_i32_47 = arith.constant 16 : i32
    %132 = vector.broadcast %c16_i32_47 : i32 to vector<1x128xi32>
    %133 = arith.cmpi slt, %129, %132 : vector<1x128xi32>
    %134 = arith.andi %131, %133 : vector<1x128xi1>
    %cst_48 = arith.constant 0.000000e+00 : f32
    %135 = vector.shape_cast %134 : vector<1x128xi1> to vector<1x128xi1>
    %136 = vector.broadcast %135 : vector<1x128xi1> to vector<4x128xi1>
    %137 = vector.broadcast %cst_48 : f32 to vector<4x128xf32>
    %138 = arith.select %136, %127, %137 : vector<4x128xi1>, vector<4x128xf32>
    %c32 = arith.constant 32 : index
    %c0_49 = arith.constant 0 : index
    %139 = vector.load %arg7[%c32, %c0_49] : memref<36x128xf32, #tpu.memory_space<vmem>>, vector<4x128xf32>
    tpu.vector_store %arg7[%c32, %c0_49], %138 {strides = array<i32>} : memref<36x128xf32, #tpu.memory_space<vmem>>, vector<4x128xf32>,
    %c0_50 = arith.constant 0 : index
    %c0_51 = arith.constant 0 : index
    %140 = vector.load %arg3[%c0_50, %c0_51] : memref<8x36xf32, #tpu.memory_space<vmem>>, vector<8x36xf32>
    %c0_52 = arith.constant 0 : index
    %c0_53 = arith.constant 0 : index
    %141 = vector.load %arg7[%c0_52, %c0_53] : memref<36x128xf32, #tpu.memory_space<vmem>>, vector<36x128xf32>
    %cst_54 = arith.constant dense<0.000000e+00> : vector<8x128xf32>
    %142 = tpu.matmul %140, %141, %cst_54 {dimension_numbers = #tpu.dot_dimension_numbers<[1], [0], [0], [1], [0, 0, 1, 1], [], []>} : vector<8x36xf32>, vector<36x128xf32>, vector<8x128xf32> -> vector<8x128xf32>
    %c0_55 = arith.constant 0 : index
    %c0_56 = arith.constant 0 : index
    %143 = vector.load %arg4[%c0_55, %c0_56] : memref<8x1xf32, #tpu.memory_space<vmem>>, vector<8x1xf32>
    %144 = vector.broadcast %143 : vector<8x1xf32> to vector<8x128xf32>
    %145 = arith.addf %142, %144 : vector<8x128xf32>
    %cst_57 = arith.constant 0.000000e+00 : f32
    %146 = vector.broadcast %cst_57 : f32 to vector<8x128xf32>
    %147 = arith.cmpf oge, %145, %146 : vector<8x128xf32>
    %cst_58 = arith.constant 2.000000e-01 : f32
    %148 = vector.broadcast %cst_58 : f32 to vector<8x128xf32>
    %149 = arith.mulf %148, %145 : vector<8x128xf32>
    %150 = arith.select %147, %145, %149 : vector<8x128xi1>, vector<8x128xf32>
    %151 = vector.extract_strided_slice %5 {offsets = [0, 17], sizes = [4, 128], strides = [1, 1]} : vector<4x162xf32> to vector<4x128xf32>
    %152 = tpu.concatenate %151, %150 in 0 : vector<4x128xf32>, vector<8x128xf32> -> vector<12x128xf32>
    %c0_59 = arith.constant 0 : index
    %c0_60 = arith.constant 0 : index
    %c0_61 = arith.constant 0 : index
    %153 = vector.load %arg5[%c0_59, %c0_60, %c0_61] : memref<1x12x128xf32, #tpu.memory_space<vmem>>, vector<1x12x128xf32>
    %154 = vector.shape_cast %153 : vector<1x12x128xf32> to vector<12x128xf32>
    %155 = vector.shape_cast %152 : vector<12x128xf32> to vector<1x12x128xf32>
    tpu.vector_store %arg5[%c0_59, %c0_60, %c0_61], %155 {strides = array<i32>} : memref<1x12x128xf32, #tpu.memory_space<vmem>>, vector<1x12x128xf32>,
    return
  }
  func.func @transform_0(%arg0: i32, %arg1: i32) -> (i32, i32, i32) {
    %c0_i32 = arith.constant 0 : i32
    %c0_i32_0 = arith.constant 0 : i32
    %c0_i32_1 = arith.constant 0 : i32
    return %arg0, %c0_i32, %c0_i32_0 : i32, i32, i32
  }
  func.func @transform_1(%arg0: i32, %arg1: i32) -> (i32, i32) {
    %c0_i32 = arith.constant 0 : i32
    %c0_i32_0 = arith.constant 0 : i32
    %c0_i32_1 = arith.constant 0 : i32
    return %c0_i32, %c0_i32_0 : i32, i32
  }
  func.func @transform_2(%arg0: i32, %arg1: i32) -> (i32, i32) {
    %c0_i32 = arith.constant 0 : i32
    %c0_i32_0 = arith.constant 0 : i32
    %c0_i32_1 = arith.constant 0 : i32
    return %c0_i32, %c0_i32_0 : i32, i32
  }
  func.func @transform_3(%arg0: i32, %arg1: i32) -> (i32, i32, i32) {
    %c0_i32 = arith.constant 0 : i32
    %c0_i32_0 = arith.constant 0 : i32
    return %arg0, %c0_i32, %arg1 : i32, i32, i32
  }
}

</mosaic_0001>

<llo_original>
// kernel: tpu_custom_call.1
$region0: #{tpu_custom_call.1}
  #allocation0 [shape = 'u32[]', space=smem, size = 0x4, offset = 0x4, fixed_abs, tag = 'smem constant byte address 0x4 - core index']
  #allocation1 [shape = 'u32[144,128]{1,0:T(1,128)}', space=vmem, size = 0x12000, scoped, tag = 'internal scratch']
  #allocation2 [shape = 'f32[2,4,162]{2,1,0:T(4,128)}', space=vmem, size = 0x2000, scoped, tag = 'scratch operand']
  #allocation3 [shape = 'f32[36,128]{1,0:T(8,128)}', space=vmem, size = 0x5000, scoped, tag = 'scratch operand']
  %s0 = inlined_call_operand.hbm [shape: f32[2,4,256], index: 0, kind: input, shape index: {}]
  %s1 = inlined_call_operand.vmem [shape: f32[8,36], index: 1, kind: input, shape index: {}]
  %s2 = inlined_call_operand.vmem [shape: f32[8,1], index: 2, kind: input, shape index: {}]
  %s3 = inlined_call_operand.vmem [shape: f32[2,12,256], index: 3, kind: output, shape index: {}]
  %s4 = sld [smem:[#allocation0]]
  $region87: #{tpu_custom_call.1} parent=0
    _
  %s6 = ssub.s32 1, %s4
  %s7 = scalar_select 0, %s6, %s4
  $region1: #{tpu_custom_call.1} parent=0
    #allocation4 [shape = 'u8[8192]{0}', space=vmem, size = 0x2000, scoped, tag = 'input window, operand 0']
    #allocation5 [shape = 's32[2]{0}', space=sflag, size = 0x8, scoped, tag = 'scoped memory for tpu_custom_call.1']
    #allocation6 [shape = 'u8[16384]{0}', space=vmem, size = 0x4000, scoped, tag = 'output window, operand 0']
    %8 = vsyncpa [#allocation5], 0
    %s9 = scalar_lea.sflag [#allocation5], 1
    %10 = vsyncpa %s9, 0
    loop: start=0, step=1, limit=6
    $region2: #{tpu_custom_call.1} parent=1 // loop_pre_header
      _
    $region3: #{tpu_custom_call.1} parent=1 // loop_header
      %s12 = sphi 0, %s16
      %p13 = scmp.ge.s32.totalorder %s12, 6
      %s19 = sphi 0, %s31
      %s20 = sphi 0, %s27
      %s21 = sphi 0, %s19
      %s22 = sphi 0, %s20
      %s23 = sphi 0, %s21
      %s24 = sphi 0, %s22
      %s34 = sphi 0, %s36
      %s37 = sphi 0, %s34
      %s38 = sphi 0, %s37
      %s54 = sphi 0, %s38
      %s58 = sphi 0, %s58
      %s60 = sphi 0, %s58
      %s61 = sphi 0, %s60
      %s75 = sphi 0, %s61
      %s79 = sphi 0, %s79
      %s81 = sphi 0, %s79
      %s82 = sphi 0, %s81
      %s96 = sphi 0, %s82
      %s104 = sphi 0, %s106
      %s107 = sphi 0, %s104
      %s108 = sphi 0, %s107
      %s124 = sphi 0, %s108
    $region4: #{tpu_custom_call.1} parent=1 // loop_header_branch
      %15 = sbr.rel (%p13) target = $region8
    $region5: #{tpu_custom_call.1} parent=1 // loop_body
      %s17 = ssub.s32 %s12, 1
      %s18 = ssub.s32 %s12, 2
      %s25 = sadd.s32 1, %s20
      %p26 = scmp.ge.s32.totalorder %s25, 2
      %s27 = scalar_select %p26, 0, %s25
      %s28 = sadd.s32 1, %s19
      %s29 = scalar_select %p26, %s28, %s19
      %p30 = scmp.ge.s32.totalorder %s29, 2
      %s31 = scalar_select %p30, 0, %s29
      %s32 = ssub.s32 %s19, %s31
      %p33 = scmp.eq.s32.totalorder %s32, 0
      %s35 = sadd.s32 %s34, 1
      %s36 = scalar_select %p33, %s34, %s35
      %p39 = pneg %p33
      %p40 = scmp.eq.s32.totalorder %s12, 3
      %p41 = por %p39, %p40
      %p42 = scmp.ne.s32.totalorder %s34, %s37
      %p43 = scmp.eq.s32.totalorder %s12, 0
      %p44 = por %p42, %p43
      %p45 = scmp.ne.s32.totalorder %s34, %s37
      %p46 = scmp.eq.s32.totalorder %s17, 3
      %p47 = por %p45, %p46
      %p48 = scmp.ne.s32.totalorder %s37, %s38
      %p49 = scmp.eq.s32.totalorder %s17, 0
      %p50 = por %p48, %p49
      %p51 = scmp.ne.s32.totalorder %s37, %s38
      %p52 = scmp.eq.s32.totalorder %s18, 3
      %p53 = por %p51, %p52
      %p55 = scmp.ne.s32.totalorder %s38, %s54
      %p56 = scmp.eq.s32.totalorder %s18, 0
      %p57 = por %p55, %p56
      %s59 = sadd.s32 %s58, 1
      %p62 = scmp.eq.s32.totalorder %s12, 3
      %p63 = scmp.ne.s32.totalorder %s58, %s60
      %p64 = scmp.eq.s32.totalorder %s12, 0
      %p65 = por %p63, %p64
      %p66 = scmp.ne.s32.totalorder %s58, %s60
      %p67 = scmp.eq.s32.totalorder %s17, 3
      %p68 = por %p66, %p67
      %p69 = scmp.ne.s32.totalorder %s60, %s61
      %p70 = scmp.eq.s32.totalorder %s17, 0
      %p71 = por %p69, %p70
      %p72 = scmp.ne.s32.totalorder %s60, %s61
      %p73 = scmp.eq.s32.totalorder %s18, 3
      %p74 = por %p72, %p73
      %p76 = scmp.ne.s32.totalorder %s61, %s75
      %p77 = scmp.eq.s32.totalorder %s18, 0
      %p78 = por %p76, %p77
      %s80 = sadd.s32 %s79, 1
      %p83 = scmp.eq.s32.totalorder %s12, 3
      %p84 = scmp.ne.s32.totalorder %s79, %s81
      %p85 = scmp.eq.s32.totalorder %s12, 0
      %p86 = por %p84, %p85
      %p87 = scmp.ne.s32.totalorder %s79, %s81
      %p88 = scmp.eq.s32.totalorder %s17, 3
      %p89 = por %p87, %p88
      %p90 = scmp.ne.s32.totalorder %s81, %s82
      %p91 = scmp.eq.s32.totalorder %s17, 0
      %p92 = por %p90, %p91
      %p93 = scmp.ne.s32.totalorder %s81, %s82
      %p94 = scmp.eq.s32.totalorder %s18, 3
      %p95 = por %p93, %p94
      %p97 = scmp.ne.s32.totalorder %s82, %s96
      %p98 = scmp.eq.s32.totalorder %s18, 0
      %p99 = por %p97, %p98
      %s100 = ssub.s32 %s19, %s31
      %s101 = ssub.s32 %s20, %s27
      %s102 = sor.u32 %s100, %s101
      %p103 = scmp.eq.s32.totalorder %s102, 0
      %s105 = sadd.s32 %s104, 1
      %s106 = scalar_select %p103, %s104, %s105
      %p109 = pneg %p103
      %p110 = scmp.eq.s32.totalorder %s12, 3
      %p111 = por %p109, %p110
      %p112 = scmp.ne.s32.totalorder %s104, %s107
      %p113 = scmp.eq.s32.totalorder %s12, 0
      %p114 = por %p112, %p113
      %p115 = scmp.ne.s32.totalorder %s104, %s107
      %p116 = scmp.eq.s32.totalorder %s17, 3
      %p117 = por %p115, %p116
      %p118 = scmp.ne.s32.totalorder %s107, %s108
      %p119 = scmp.eq.s32.totalorder %s17, 0
      %p120 = por %p118, %p119
      %p121 = scmp.ne.s32.totalorder %s107, %s108
      %p122 = scmp.eq.s32.totalorder %s18, 3
      %p123 = por %p121, %p122
      %p125 = scmp.ne.s32.totalorder %s108, %s124
      %p126 = scmp.eq.s32.totalorder %s18, 0
      %p127 = por %p125, %p126
      %p128 = scmp.le.s32.totalorder 1, %s12
      %p129 = scmp.lt.s32.totalorder %s12, 5
      %p130 = pnand %p128, %p129
      %p131 = pneg %p130
      // Predicated region
      $region9: #{tpu_custom_call.1} parent=5 // pred_check
        _
      $region10: #{tpu_custom_call.1} parent=5 // pred_check_branch
        %133 = sbr.rel (%p130) target = $region12
      $region11: #{tpu_custom_call.1} parent=5 // pred_region
        %s134 = ssub.s32 %s12, 1
        // Predicated region
        $region13: #{tpu_custom_call.1} parent=11 // pred_check
          %p135 = pneg %p71
        $region14: #{tpu_custom_call.1} parent=11 // pred_check_branch
          %137 = sbr.rel (%p135) target = $region16
        $region15: #{tpu_custom_call.1} parent=11 // pred_region
          _
        $region16: #{tpu_custom_call.1} parent=11 // pred_fallthru
          _
        // Predicated region
        $region17: #{tpu_custom_call.1} parent=11 // pred_check
          %p138 = pneg %p92
        $region18: #{tpu_custom_call.1} parent=11 // pred_check_branch
          %140 = sbr.rel (%p138) target = $region20
        $region19: #{tpu_custom_call.1} parent=11 // pred_region
          _
        $region20: #{tpu_custom_call.1} parent=11 // pred_fallthru
          _
      $region12: #{tpu_custom_call.1} parent=5 // pred_fallthru
        _
      %p141 = scmp.lt.s32.totalorder %s12, 4
      // Predicated region
      $region21: #{tpu_custom_call.1} parent=5 // pred_check
        %p142 = pneg %p141
      $region22: #{tpu_custom_call.1} parent=5 // pred_check_branch
        %144 = sbr.rel (%p142) target = $region24
      $region23: #{tpu_custom_call.1} parent=5 // pred_region
        // Predicated region
        $region25: #{tpu_custom_call.1} parent=23 // pred_check
          %p145 = pneg %p44
        $region26: #{tpu_custom_call.1} parent=23 // pred_check_branch
          %147 = sbr.rel (%p145) target = $region28
        $region27: #{tpu_custom_call.1} parent=23 // pred_region
          %s148 = sand.u32 %s34, 1
          %s149 = scalar_lea.sflag [#allocation5], %s148
          %s150 = sand.u32 %s34, 1
          %s151 = smul.addr %s150, 8
          %s152 = scalar_lea.vmem [#allocation4], %s151
          %s154 = ssub.s32 128, 128
          %155 = vsyncadd %s149, %s154
          %s156 = smul.addr %s19, 2
          %s157 = smul.addr %s156, 64
          %s158 = scalar_lea.hbm %s0, %s157
          %s160 = sshll.u32 %s152, 4
          %s161 = int_to_ptr.vmem [resolvable:$true] %s160
          %163 = dma.hbm_to_vmem [thread:$0]  %s158, 128, %s161, %s149
        $region28: #{tpu_custom_call.1} parent=23 // pred_fallthru
          _
      $region24: #{tpu_custom_call.1} parent=5 // pred_fallthru
        _
      %p164 = scmp.le.s32.totalorder 1, %s12
      %p165 = scmp.lt.s32.totalorder %s12, 5
      %p166 = pnand %p164, %p165
      %p167 = pneg %p166
      // Predicated region
      $region29: #{tpu_custom_call.1} parent=5 // pred_check
        _
      $region30: #{tpu_custom_call.1} parent=5 // pred_check_branch
        %169 = sbr.rel (%p166) target = $region32
      $region31: #{tpu_custom_call.1} parent=5 // pred_region
        %s170 = ssub.s32 %s12, 1
        %s171 = sand.u32 %s37, 1
        %s172 = scalar_lea.sflag [#allocation5], %s171
        %s173 = sand.u32 %s37, 1
        %s174 = smul.addr %s173, 8
        %s175 = scalar_lea.vmem [#allocation4], %s174
        // Predicated region
        $region33: #{tpu_custom_call.1} parent=31 // pred_check
          %p176 = pneg %p50
        $region34: #{tpu_custom_call.1} parent=31 // pred_check_branch
          %178 = sbr.rel (%p176) target = $region36
        $region35: #{tpu_custom_call.1} parent=31 // pred_region
          %179 = dma.done %s172, 128
        $region36: #{tpu_custom_call.1} parent=31 // pred_fallthru
          _
        %s180 = sand.u32 %s37, 1
        %s181 = scalar_lea.sflag [#allocation5], %s180
        %s182 = sand.u32 %s37, 1
        %s183 = smul.addr %s182, 8
        %s184 = scalar_lea.vmem [#allocation4], %s183
        %p185 = pneg %p50
        %p186 = pneg %p47
        %p187 = pneg %p71
        %p188 = pneg %p68
        %p189 = pneg %p92
        %p190 = pneg %p89
        %p191 = pneg %p120
        %p192 = pneg %p117
        %s193 = sand.u32 %s107, 1
        %s194 = sand.u32 %s107, 1
        %s195 = smul.addr %s194, 16
        %s196 = scalar_lea.vmem [#allocation6], %s195
        %p197 = scmp.eq.s32.totalorder %s22, 0
        // Predicated region
        $region37: #{tpu_custom_call.1} parent=31 // pred_check
          %p198 = pneg %p197
        $region38: #{tpu_custom_call.1} parent=31 // pred_check_branch
          %200 = sbr.rel (%p198) target = $region40
        $region39: #{tpu_custom_call.1} parent=31 // pred_region
          %vm201 = vcmask 134144
          %202 = vst.msk [vmem:[#allocation2] sm:$0xf] %vm201, 0.0
          %v203 = vld [vmem:[%s175] sm:$0xff]
          %205 = vrot.lane.b32.xlu0 %v203, 17
          %v206 = vpop.permute.xlu0 %205
          %v207 = vrot.slane %v206, 4
          %vm208 = vcmask 138240
          %v209 = vsel %vm208, %v207, %v206
          %vm211 = vcmask 1043592
          %vm212 = vcmask 277508
          %vm213 = vmor %vm212, %vm211
          %214 = vst.msk [vmem:[#allocation2] sm:$0xff] %vm213, %v209
          %s215 = scalar_lea.vmem [#allocation2], 8
          %vm216 = vcmask 273544
          %217 = vst.msk [vmem:[%s215 + $0x4] sm:$0xf] %vm216, 0.0
          %v218 = vld [vmem:[%s175] sm:$0xff]
          %220 = vrot.lane.b32.xlu0 %v218, 17
          %v221 = vpop.permute.xlu0 %220
          %v222 = vrot.slane %v221, 4
          %v223 = vsel %vm208, %v221, %v222
          %vm225 = vcmask 1043456
          %vm226 = vcmask 138244
          %vm227 = vmor %vm226, %vm225
          %228 = vst.msk [vmem:[%s215] sm:$0xff] %vm227, %v223
        $region40: #{tpu_custom_call.1} parent=31 // pred_fallthru
          _
        %s229 = smul.u32 %s22, 2
        %s230 = smul.addr %s229, 4
        %s231 = scalar_lea.vmem [#allocation2], %s230
        %v232 = vld [vmem:[%s231] sm:$0xff]
        %v233 = vlaneseq
        %v234 = vand.u32 %v233, 127
        %vm235 = vcmp.lt.s32.totalorder %v234, 0
        %v236 = vsub.s32 0, %v234
        %v237 = vsel %vm235, %v236, %v234
        %v238 = vshrl.u32 %v237, 4
        %v239 = vand.u32 %v237, 15
        %v240 = vsub.s32 0, %v239
        %v241 = vsel %vm235, %v240, %v239
        %vm242 = vcmp.ne.s32.totalorder %v241, 0
        %vm243 = vcmp.lt.s32.totalorder %v241, 0
        %vm244 = vmand %vm243, %vm242
        %v245 = vadd.s32 %v241, 16
        %v246 = vsel %vm244, %v245, %v241
        %v247 = vadd.s32 %v246, 4294967295
        %vm248 = vcmp.ge.s32.totalorder %v247, 0
        %vm249 = vcmp.lt.s32.totalorder %v247, 16
        %vm250 = vmand %vm248, %vm249
        %v251 = vsel %vm250, 1, 0
        %vm252 = vcmp.eq.s32.totalorder %v251, 1
        %v253 = vsel %vm252, %v232, 0.0
        %254 = vst [vmem:[#allocation3] sm:$0xf] %v253
        %vm255 = vcmp.ge.s32.totalorder %v246, 0
        %vm256 = vcmp.lt.s32.totalorder %v246, 16
        %vm257 = vmand %vm255, %vm256
        %v258 = vsel %vm257, 1, 0
        %vm259 = vcmp.eq.s32.totalorder %v258, 1
        %v261 = vcombine.high %v232, %v232
        %262 = vrot.lane.b32.xlu0 %v232, 127
        %v263 = vpop.permute.xlu0 %262
        %264 = vrot.lane.b32.xlu0 %v261, 127
        %v265 = vpop.permute.xlu0 %264
        %vm266 = vcmask 1039360
        %v267 = vsel %vm266, %v263, %v265
        %v269 = vsel %vm259, %v267, 0.0
        %270 = vst [vmem:[#allocation3 + $0x4] sm:$0xf] %v269
        %v271 = vadd.s32 %v246, 1
        %vm272 = vcmp.ge.s32.totalorder %v271, 0
        %vm273 = vcmp.lt.s32.totalorder %v271, 16
        %vm274 = vmand %vm272, %vm273
        %v275 = vsel %vm274, 1, 0
        %vm276 = vcmp.eq.s32.totalorder %v275, 1
        %277 = vrot.lane.b32.xlu0 %v232, 126
        %v278 = vpop.permute.xlu0 %277
        %279 = vrot.lane.b32.xlu0 %v261, 126
        %v280 = vpop.permute.xlu0 %279
        %vm281 = vcmask 1031168
        %v282 = vsel %vm281, %v278, %v280
        %v284 = vsel %vm276, %v282, 0.0
        %285 = vst [vmem:[#allocation3 + $0x8] sm:$0xf] %v284
        %286 = vrot.lane.b32.xlu0 %v232, 112
        %v287 = vpop.permute.xlu0 %286
        %288 = vrot.lane.b32.xlu0 %v261, 112
        %v289 = vpop.permute.xlu0 %288
        %vm290 = vcmask 916480
        %v291 = vsel %vm290, %v287, %v289
        %v293 = vsel %vm252, %v291, 0.0
        %294 = vst [vmem:[#allocation3 + $0xc] sm:$0xf] %v293
        %295 = vrot.lane.b32.xlu0 %v232, 111
        %v296 = vpop.permute.xlu0 %295
        %297 = vrot.lane.b32.xlu0 %v261, 111
        %v298 = vpop.permute.xlu0 %297
        %vm299 = vcmask 908288
        %v300 = vsel %vm299, %v296, %v298
        %v302 = vsel %vm259, %v300, 0.0
        %303 = vst [vmem:[#allocation3 + $0x10] sm:$0xf] %v302
        %304 = vrot.lane.b32.xlu0 %v232, 110
        %v305 = vpop.permute.xlu0 %304
        %306 = vrot.lane.b32.xlu0 %v261, 110
        %v307 = vpop.permute.xlu0 %306
        %vm308 = vcmask 900096
        %v309 = vsel %vm308, %v305, %v307
        %v311 = vsel %vm276, %v309, 0.0
        %312 = vst [vmem:[#allocation3 + $0x14] sm:$0xf] %v311
        %313 = vrot.lane.b32.xlu0 %v232, 96
        %v314 = vpop.permute.xlu0 %313
        %315 = vrot.lane.b32.xlu0 %v261, 96
        %v316 = vpop.permute.xlu0 %315
        %vm317 = vcmask 785408
        %v318 = vsel %vm317, %v314, %v316
        %v320 = vsel %vm252, %v318, 0.0
        %321 = vst [vmem:[#allocation3 + $0x18] sm:$0xf] %v320
        %322 = vrot.lane.b32.xlu0 %v232, 95
        %v323 = vpop.permute.xlu0 %322
        %324 = vrot.lane.b32.xlu0 %v261, 95
        %v325 = vpop.permute.xlu0 %324
        %vm326 = vcmask 777216
        %v327 = vsel %vm326, %v323, %v325
        %v329 = vsel %vm259, %v327, 0.0
        %330 = vst [vmem:[#allocation3 + $0x1c] sm:$0xf] %v329
        %331 = vrot.lane.b32.xlu0 %v232, 94
        %v332 = vpop.permute.xlu0 %331
        %333 = vrot.lane.b32.xlu0 %v261, 94
        %v334 = vpop.permute.xlu0 %333
        %vm335 = vcmask 769024
        %v336 = vsel %vm335, %v332, %v334
        %v338 = vsel %vm276, %v336, 0.0
        %339 = vst [vmem:[#allocation3 + $0x20] sm:$0xf] %v338
        %v340 = vld [vmem:[%s1] sm:$0xff]
        %v341 = vld [vmem:[#allocation3] sm:$0xff]
        %v342 = vld [vmem:[#allocation3 + $0x8] sm:$0xff]
        %v343 = vld [vmem:[#allocation3 + $0x10] sm:$0xff]
        %v344 = vld [vmem:[#allocation3 + $0x18] sm:$0xff]
        %v345 = vld [vmem:[#allocation3 + $0x20] sm:$0xf]
        %v346 = vld [vmem:[%s2] sm:$0xff]
        %348 = vset.pattern.permute.xlu0 0
        %349 = vperm.xlu0 %348, %v346
        %v350 = vpop.permute.xlu0 %349
        %vm352 = vcmask 293888
        %v354 = vsel %vm352, %v340, 0
        %vm356 = vcmask 1043456
        %v358 = vsel %vm356, %v345, 0
        %360 = vmatprep.subr.mxu0 0.0
        %361 = vmatpush1.msra.mxu0 %v341
        %362 = vmatprep.subr.mxu0 0.0
        %363 = vmatpush1.msra.mxu0 %v342
        %364 = vmatprep.subr.mxu0 0.0
        %365 = vmatpush1.msra.mxu0 %v343
        %366 = vmatprep.subr.mxu0 0.0
        %367 = vmatpush1.msra.mxu0 %v344
        %368 = vmatprep.subr.mxu0 0.0
        %369 = vmatpush1.msra.mxu0 %v358
        %370 = vmatprep.subr.mxu0 0.0
        %371 = vmatpush1.msra.mxu0 0.0
        %372 = vmatprep.subr.mxu0 0.0
        %373 = vmatpush1.msra.mxu0 0.0
        %374 = vmatprep.subr.mxu0 0.0
        %375 = vmatpush1.msra.mxu0 0.0
        %376 = vmatprep.subr.mxu0 0.0
        %377 = vmatpush1.msra.mxu0 0.0
        %378 = vmatprep.subr.mxu0 0.0
        %379 = vmatpush1.msra.mxu0 0.0
        %380 = vmatprep.subr.mxu0 0.0
        %381 = vmatpush1.msra.mxu0 0.0
        %382 = vmatprep.subr.mxu0 0.0
        %383 = vmatpush1.msra.mxu0 0.0
        %384 = vmatprep.subr.mxu0 0.0
        %385 = vmatpush1.msra.mxu0 0.0
        %386 = vmatprep.subr.mxu0 0.0
        %387 = vmatpush1.msra.mxu0 0.0
        %388 = vmatprep.subr.mxu0 0.0
        %389 = vmatpush1.msra.mxu0 0.0
        %390 = vmatprep.subr.mxu0 0.0
        %391 = vmatpush1.msra.mxu0 0.0
        %392 = vmatprep.subr.mxu0 0.0
        %393 = vmatpush1.msra.mxu0 0.0
        %394 = vmatprep.subr.mxu0 0.0
        %395 = vmatpush1.msra.mxu0 0.0
        %396 = vmatprep.subr.mxu0 0.0
        %397 = vmatpush1.msra.mxu0 0.0
        %398 = vmatprep.subr.mxu0 0.0
        %399 = vmatpush1.msra.mxu0 0.0
        %400 = vmatprep.subr.mxu0 0.0
        %401 = vmatpush1.msra.mxu0 0.0
        %402 = vmatprep.subr.mxu0 0.0
        %403 = vmatpush1.msra.mxu0 0.0
        %404 = vmatprep.subr.mxu0 0.0
        %405 = vmatpush1.msra.mxu0 0.0
        %406 = vmatprep.subr.mxu0 0.0
        %407 = vmatpush1.msra.mxu0 0.0
        %408 = vmatprep.subr.mxu0 0.0
        %409 = vmatpush1.msra.mxu0 0.0
        %410 = vmatprep.subr.mxu0 0.0
        %411 = vmatpush1.msra.mxu0 0.0
        %412 = vmatprep.subr.mxu0 0.0
        %413 = vmatpush1.msra.mxu0 0.0
        %414 = vmatprep.subr.mxu0 0.0
        %415 = vmatpush1.msra.mxu0 0.0
        %416 = vmatprep.subr.mxu0 0.0
        %417 = vmatpush1.msra.mxu0 0.0
        %418 = vmatprep.subr.mxu0 0.0
        %419 = vmatpush1.msra.mxu0 0.0
        %420 = vmatprep.subr.mxu0 0.0
        %421 = vmatpush1.msra.mxu0 0.0
        %422 = vmatprep.subr.mxu0 0.0
        %423 = vmatpush1.msra.mxu0 0.0
        %424 = vmatprep.mubr.f32.mxu0 0.0
        %425 = vmatmul.mubr.f32.gmra.mrb[0].mxu0 %v354
        %v426 = vpop.f32.mrb[0].mxu0
        %v427 = vadd.f32 %v350, %v426
        %v428 = vpop.f32.mrb[0].mxu0
        %429 = vdwg.mxu0
        %vm430 = vcmp.ge.f32.partialorder %v427, 0.0
        %v431 = vmul.f32 %v427, 0.2
        %v432 = vsel %vm430, %v427, %v431
        %v435 = vrot.slane %v432, 4
        %436 = vrot.lane.b32.xlu0 %v435, 17
        %v437 = vpop.permute.xlu0 %436
        %v439 = vsel %vm356, %v232, %v437
        %v440 = vsel %vm356, %v261, %v437
        %443 = vrot.lane.b32.xlu0 %v439, 111
        %v444 = vpop.permute.xlu0 %443
        %445 = vrot.lane.b32.xlu0 %v440, 111
        %v446 = vpop.permute.xlu0 %445
        %447 = vrot.lane.b32.xlu0 %v437, 111
        %v448 = vpop.permute.xlu0 %447
        %v449 = vsel %vm299, %v444, %v446
        %452 = vst [vmem:[%s196] sm:$0xff] %v449
        %453 = vst [vmem:[%s196 + $0x8] sm:$0xf] %v448
        %s454 = sand.u32 %s107, 1
        %s455 = sand.u32 %s107, 1
        %s456 = smul.addr %s455, 16
        %s457 = scalar_lea.vmem [#allocation6], %s456
        // Predicated region
        $region41: #{tpu_custom_call.1} parent=31 // pred_check
          %p458 = pneg %p117
        $region42: #{tpu_custom_call.1} parent=31 // pred_check_branch
          %460 = sbr.rel (%p458) target = $region44
        $region43: #{tpu_custom_call.1} parent=31 // pred_region
          %s461 = smul.addr %s21, 4
          %s462 = sadd.s32 %s22, %s461
          %s463 = smul.addr %s462, 8
          %s464 = scalar_lea.vmem %s3, %s463
          // Predicated region
          $region45: #{tpu_custom_call.1} parent=43 // pred_check
            _
          $region46: #{tpu_custom_call.1} parent=43 // pred_check_branch
            %466 = sbr.rel (0) target = $region48
          $region47: #{tpu_custom_call.1} parent=43 // pred_region
            // Predicated region
            $region49: #{tpu_custom_call.1} parent=47 // pred_check
              _
            $region50: #{tpu_custom_call.1} parent=47 // pred_check_branch
              %468 = sbr.rel (0) target = $region52
            $region51: #{tpu_custom_call.1} parent=47 // pred_region
              // Predicated region
              $region64: #{tpu_custom_call.1} parent=51 // pred_check
                _
              $region65: #{tpu_custom_call.1} parent=51 // pred_check_branch
                %485 = sbr.rel (0) target = $region67
              $region66: #{tpu_custom_call.1} parent=51 // pred_region
                loop: start=0, step=1, limit=1
                $region68: #{tpu_custom_call.1} parent=66 // loop_pre_header
                  _
                $region69: #{tpu_custom_call.1} parent=66 // loop_header
                  %s487 = sphi 0, %s491
                  %p488 = scmp.ge.s32.totalorder %s487, 1
                  %s492 = sphi %s457, %s457
                  %s493 = sphi %s464, %s464
                $region70: #{tpu_custom_call.1} parent=66 // loop_header_branch
                  %490 = sbr.rel (%p488) target = $region74
                $region71: #{tpu_custom_call.1} parent=66 // loop_body
                  %v494 = vld [vmem:[%s492] sm:$0xff]
                  %495 = vst [vmem:[%s493] sm:$0xff] %v494
                  %v496 = vld [vmem:[%s492 + $0x8] sm:$0xff]
                  %497 = vst [vmem:[%s493 + $0x10] sm:$0xff] %v496
                $region72: #{tpu_custom_call.1} parent=66 // loop_footer
                  %s491 = sadd.s32 1, %s487
                $region73: #{tpu_custom_call.1} parent=66 // loop_footer_branch
                  %486 = sbr.rel target = $region69
                $region74: #{tpu_custom_call.1} parent=66 // loop_exit
                  _
              $region67: #{tpu_custom_call.1} parent=51 // pred_fallthru
                _
              // Predicated region
              $region75: #{tpu_custom_call.1} parent=51 // pred_check
                _
              $region76: #{tpu_custom_call.1} parent=51 // pred_check_branch
                %499 = sbr.rel target = $region78
              $region77: #{tpu_custom_call.1} parent=51 // pred_region
                _
              $region78: #{tpu_custom_call.1} parent=51 // pred_fallthru
                _
            $region52: #{tpu_custom_call.1} parent=47 // pred_fallthru
              _
            // Predicated region
            $region53: #{tpu_custom_call.1} parent=47 // pred_check
              _
            $region54: #{tpu_custom_call.1} parent=47 // pred_check_branch
              %470 = sbr.rel target = $region56
            $region55: #{tpu_custom_call.1} parent=47 // pred_region
              loop: start=0, step=1, limit=1
              $region57: #{tpu_custom_call.1} parent=55 // loop_pre_header
                _
              $region58: #{tpu_custom_call.1} parent=55 // loop_header
                %s473 = sphi 0, %s477
                %p474 = scmp.ge.s32.totalorder %s473, 1
                %s478 = sphi %s457, %s457
                %s479 = sphi %s464, %s464
              $region59: #{tpu_custom_call.1} parent=55 // loop_header_branch
                %476 = sbr.rel (%p474) target = $region63
              $region60: #{tpu_custom_call.1} parent=55 // loop_body
                %v480 = vld [vmem:[%s478] sm:$0xff]
                %481 = vst [vmem:[%s479] sm:$0xff] %v480
                %v482 = vld [vmem:[%s478 + $0x8] sm:$0xff]
                %483 = vst [vmem:[%s479 + $0x10] sm:$0xff] %v482
              $region61: #{tpu_custom_call.1} parent=55 // loop_footer
                %s477 = sadd.s32 1, %s473
              $region62: #{tpu_custom_call.1} parent=55 // loop_footer_branch
                %472 = sbr.rel target = $region58
              $region63: #{tpu_custom_call.1} parent=55 // loop_exit
                _
            $region56: #{tpu_custom_call.1} parent=47 // pred_fallthru
              _
          $region48: #{tpu_custom_call.1} parent=43 // pred_fallthru
            _
          %500 = vnop
        $region44: #{tpu_custom_call.1} parent=31 // pred_fallthru
          _
      $region32: #{tpu_custom_call.1} parent=5 // pred_fallthru
        _
      %p501 = scmp.le.s32.totalorder 2, %s12
      // Predicated region
      $region79: #{tpu_custom_call.1} parent=5 // pred_check
        %p502 = pneg %p501
      $region80: #{tpu_custom_call.1} parent=5 // pred_check_branch
        %504 = sbr.rel (%p502) target = $region82
      $region81: #{tpu_custom_call.1} parent=5 // pred_region
        %s505 = ssub.s32 %s12, 2
        // Predicated region
        $region83: #{tpu_custom_call.1} parent=81 // pred_check
          %p506 = pneg %p123
        $region84: #{tpu_custom_call.1} parent=81 // pred_check_branch
          %508 = sbr.rel (%p506) target = $region86
        $region85: #{tpu_custom_call.1} parent=81 // pred_region
          %s509 = sand.u32 %s108, 1
          %s510 = sand.u32 %s108, 1
          %s511 = smul.addr %s510, 16
          %s512 = scalar_lea.vmem [#allocation6], %s511
        $region86: #{tpu_custom_call.1} parent=81 // pred_fallthru
          _
      $region82: #{tpu_custom_call.1} parent=5 // pred_fallthru
        _
    $region6: #{tpu_custom_call.1} parent=1 // loop_footer
      %s16 = sadd.s32 1, %s12
    $region7: #{tpu_custom_call.1} parent=1 // loop_footer_branch
      %11 = sbr.rel target = $region3
    $region8: #{tpu_custom_call.1} parent=1 // loop_exit
      _
    %513 = vsyncpa [#allocation5], 1
    %s514 = scalar_lea.sflag [#allocation5], 1
    %515 = vsyncpa %s514, 1

</llo_original>
